<compile_context>
chip_gen: v7x
topology: tpu7x:2x2x1
jax: 0.10.0
libtpu: 0.0.40
codegen_flags: <defaults>
</compile_context>

<pallas_src>
import functools

import jax
import jax.numpy as jnp
from jax.experimental import pallas as pl
from jax.experimental.pallas import tpu as pltpu

LANES = 128                     # edges per lane-row
DEFAULT_ROWS_PER_BLOCK = 1024   # 1024 * 128 = 131072 edges per grid step
MIN_GRID_STEPS = 4              # keep a few steps so v7x megacore can split


def _round_up(x, m):
    return ((x + m - 1) // m) * m


def _pbc_dist_kernel(cor_ref, out_ref):
    # cor_ref: (3, R, 128) f32, already PBC-corrected relative positions:
    #          cor[k] = (pos[e1] - pos[e0])[k] - (offsets @ cell)[k]
    # out_ref: (R, 128)    f32  distances
    d0 = cor_ref[0]
    d1 = cor_ref[1]
    d2 = cor_ref[2]
    out_ref[...] = jnp.sqrt(d0 * d0 + d1 * d1 + d2 * d2)


@functools.partial(jax.jit, static_argnames=("rows_per_block",))
def pbc_conv_layer(pos, edge_index, offsets, cell_vectors,
                   rows_per_block=DEFAULT_ROWS_PER_BLOCK):
    """pos: (N,3), edge_index: (2,E) int, offsets: (E,3), cell_vectors: (3,3)
    -> distances: (E,) float32"""
    pos = pos.astype(jnp.float32)
    offsets = offsets.astype(jnp.float32)
    cell_vectors = cell_vectors.astype(jnp.float32)
    edge_index = edge_index.astype(jnp.int32)

    E = edge_index.shape[1]

    # --- tiling: edges folded into (rows, 128); rows blocked per grid step ---
    r_needed = max(1, pl.cdiv(E, LANES))
    r_block = _round_up(min(rows_per_block, _round_up(r_needed, 8)), 8)
    # Keep at least a few grid steps for large problems (v7x megacore split);
    # never shrink below 64 rows (8192 edges) per step.
    while r_block > 64 and pl.cdiv(r_needed, r_block) < MIN_GRID_STEPS:
        r_block = _round_up(r_block // 2, 8)
    r_total = _round_up(r_needed, r_block)
    e_pad = r_total * LANES
    grid = (r_total // r_block,)

    # --- glue: gather + PBC correction in the transposed (lane-dense) layout -
    # Gathering from pos.T avoids any (E,3)->(3,E) transpose of the big
    # gathered arrays.  The PBC adjustment is folded in here as broadcast
    # elementwise FMAs (cell[m, :] rows times scalar-per-edge offset columns),
    # so XLA fuses gather + correction into one pass and the kernel only has
    # to stream a single (3, E) array.
    pos_t = pos.T                                               # (3, N), tiny
    rel_t = pos_t[:, edge_index[1]] - pos_t[:, edge_index[0]]   # (3, E)
    off_t = offsets.T                                           # (3, E)
    # pbc[k, e] = sum_m offsets[e, m] * cell[m, k]
    cor_t = rel_t - (cell_vectors[0][:, None] * off_t[0][None, :]
                     + cell_vectors[1][:, None] * off_t[1][None, :]
                     + cell_vectors[2][:, None] * off_t[2][None, :])

    # (3, E) -> (3, r_total, 128); padded lanes are zero -> sqrt(0) = 0.
    cor_b = jnp.pad(cor_t, ((0, 0), (0, e_pad - E))).reshape(3, r_total, LANES)

    dist_b = pl.pallas_call(
        _pbc_dist_kernel,
        out_shape=jax.ShapeDtypeStruct((r_total, LANES), jnp.float32),
        grid_spec=pltpu.PrefetchScalarGridSpec(
            num_scalar_prefetch=0,
            grid=grid,
            in_specs=[
                pl.BlockSpec((3, r_block, LANES), lambda i: (0, i, 0)),
            ],
            out_specs=pl.BlockSpec((r_block, LANES), lambda i: (i, 0)),
        ),
        compiler_params=pltpu.CompilerParams(
            dimension_semantics=("parallel",)),
    )(cor_b)

    # Padded lanes are zero and sliced off here.
    return dist_b.reshape(e_pad)[:E]


def _reference(pos, edge_index, offsets, cell_vectors):
    to_move = pos[edge_index[1]]
    pbc_adjustments = offsets @ cell_vectors
    corrected = to_move - pbc_adjustments
    return jnp.linalg.norm(corrected - pos[edge_index[0]], axis=-1)


if __name__ == "__main__":
    key = jax.random.PRNGKey(0)
    k_pos, k_ei, k_off, k_cell = jax.random.split(key, 4)

    N = 16   # number of atoms
    E = 64   # number of edges

    pos = jax.random.normal(k_pos, (N, 3), dtype=jnp.float32) * 3.0
    edge_index = jax.random.randint(k_ei, (2, E), 0, N, dtype=jnp.int32)
    # PBC image offsets in {-1, 0, 1}
    offsets = jax.random.randint(k_off, (E, 3), -1, 2).astype(jnp.float32)
    cell_vectors = (jnp.eye(3, dtype=jnp.float32) * 5.0
                    + 0.1 * jax.random.normal(k_cell, (3, 3), dtype=jnp.float32))

    dist = pbc_conv_layer(pos, edge_index, offsets, cell_vectors)
    dist = jax.block_until_ready(dist)

    ref = _reference(pos, edge_index, offsets, cell_vectors)
    assert dist.shape == (E,) and dist.dtype == jnp.float32
    assert jnp.allclose(dist, ref, atol=1e-5, rtol=1e-5)
    print("KERNEL_OK")
</pallas_src>

<mosaic_0001>
module attributes {stable_mosaic.version = 11 : i64} {
  func.func @_pbc_dist_kernel(%arg0: i32, %arg1: memref<3x8x128xf32, #tpu.memory_space<vmem>>, %arg2: memref<8x128xf32, #tpu.memory_space<vmem>>) attributes {dimension_semantics = [#tpu.dimension_semantics<parallel>], iteration_bounds = array<i64: 1>, scalar_prefetch = 0 : i64, scratch_operands = 0 : i64, tpu.core_type = #tpu.core_type<tc>, window_params = [{transform_indices = @transform_0, window_bounds = array<i64: 3, 8, 128>}, {transform_indices = @transform_1, window_bounds = array<i64: 8, 128>}]} {
    %c0 = arith.constant 0 : index
    %c0_0 = arith.constant 0 : index
    %c0_1 = arith.constant 0 : index
    %0 = vector.load %arg1[%c0, %c0_0, %c0_1] : memref<3x8x128xf32, #tpu.memory_space<vmem>>, vector<1x8x128xf32>
    %1 = vector.shape_cast %0 : vector<1x8x128xf32> to vector<8x128xf32>
    %c1 = arith.constant 1 : index
    %c0_2 = arith.constant 0 : index
    %c0_3 = arith.constant 0 : index
    %2 = vector.load %arg1[%c1, %c0_2, %c0_3] : memref<3x8x128xf32, #tpu.memory_space<vmem>>, vector<1x8x128xf32>
    %3 = vector.shape_cast %2 : vector<1x8x128xf32> to vector<8x128xf32>
    %c2 = arith.constant 2 : index
    %c0_4 = arith.constant 0 : index
    %c0_5 = arith.constant 0 : index
    %4 = vector.load %arg1[%c2, %c0_4, %c0_5] : memref<3x8x128xf32, #tpu.memory_space<vmem>>, vector<1x8x128xf32>
    %5 = vector.shape_cast %4 : vector<1x8x128xf32> to vector<8x128xf32>
    %6 = arith.mulf %1, %1 : vector<8x128xf32>
    %7 = arith.mulf %3, %3 : vector<8x128xf32>
    %8 = arith.addf %6, %7 : vector<8x128xf32>
    %9 = arith.mulf %5, %5 : vector<8x128xf32>
    %10 = arith.addf %8, %9 : vector<8x128xf32>
    %11 = math.sqrt %10 : vector<8x128xf32>
    %c0_6 = arith.constant 0 : index
    %c0_7 = arith.constant 0 : index
    %12 = vector.load %arg2[%c0_6, %c0_7] : memref<8x128xf32, #tpu.memory_space<vmem>>, vector<8x128xf32>
    tpu.vector_store %arg2[%c0_6, %c0_7], %11 {strides = array<i32>} : memref<8x128xf32, #tpu.memory_space<vmem>>, vector<8x128xf32>,
    return
  }
  func.func @transform_0(%arg0: i32) -> (i32, i32, i32) {
    %c0_i32 = arith.constant 0 : i32
    %c0_i32_0 = arith.constant 0 : i32
    %c0_i32_1 = arith.constant 0 : i32
    return %c0_i32, %arg0, %c0_i32_0 : i32, i32, i32
  }
  func.func @transform_1(%arg0: i32) -> (i32, i32) {
    %c0_i32 = arith.constant 0 : i32
    %c0_i32_0 = arith.constant 0 : i32
    return %arg0, %c0_i32 : i32, i32
  }
}

</mosaic_0001>

<llo_original>
// kernel: pbc_conv_layer.1
$region0: #{pbc_conv_layer.1}
  #allocation0 [shape = 'u32[]', space=smem, size = 0x4, offset = 0x4, fixed_abs, tag = 'smem constant byte address 0x4 - core index']
  #allocation1 [shape = 'u32[144,128]{1,0:T(1,128)}', space=vmem, size = 0x12000, scoped, tag = 'internal scratch']
  %s0 = inlined_call_operand.vmem [shape: f32[3,8,128], index: 0, kind: input, shape index: {}]
  %s1 = inlined_call_operand.vmem [shape: f32[8,128], index: 1, kind: output, shape index: {}]
  %s2 = sld [smem:[#allocation0]]
  $region14: #{pbc_conv_layer.1} parent=0
    _
  %s4 = ssub.s32 1, %s2
  %s5 = scalar_select 0, %s4, %s2
  // Predicated region
  $region2: #{pbc_conv_layer.1} parent=0 // pred_check
    _
  $region3: #{pbc_conv_layer.1} parent=0 // pred_check_branch
    %7 = sbr.rel (0) target = $region5
  $region4: #{pbc_conv_layer.1} parent=0 // pred_region
    _
  $region5: #{pbc_conv_layer.1} parent=0 // pred_fallthru
    _
  %v8 = vld [vmem:[%s0] sm:$0xff]
  %s9 = scalar_lea.vmem %s0, 8
  %v10 = vld [vmem:[%s9] sm:$0xff]
  %s11 = scalar_lea.vmem %s0, 16
  %v12 = vld [vmem:[%s11] sm:$0xff]
  %v13 = vmul.f32 %v8, %v8
  %v14 = vmul.f32 %v10, %v10
  %v15 = vadd.f32 %v13, %v14
  %v16 = vmul.f32 %v12, %v12
  %v17 = vadd.f32 %v15, %v16
  %v18 = vrsqrt.pop %v17
  %v19 = vmul.f32 %v17, %v18
  %vm20 = vcmp.eq.f32.partialorder %v17, inf
  %v21 = vsel %vm20, %v17, %v19
  %vm22 = vcmp.eq.f32.partialorder %v17, 0.0
  %v23 = vand.u32 %v17, 2147483648
  %v24 = vsel %vm22, %v23, %v21
  %25 = vst [vmem:[%s1] sm:$0xff] %v24
  // Predicated region
  $region6: #{pbc_conv_layer.1} parent=0 // pred_check
    _
  $region7: #{pbc_conv_layer.1} parent=0 // pred_check_branch
    %27 = sbr.rel (0) target = $region9
  $region8: #{pbc_conv_layer.1} parent=0 // pred_region
    _
  $region9: #{pbc_conv_layer.1} parent=0 // pred_fallthru
    _
  // Predicated region
  $region10: #{pbc_conv_layer.1} parent=0 // pred_check
    _
  $region11: #{pbc_conv_layer.1} parent=0 // pred_check_branch
    %29 = sbr.rel (0) target = $region13
  $region12: #{pbc_conv_layer.1} parent=0 // pred_region
    _
  $region13: #{pbc_conv_layer.1} parent=0 // pred_fallthru
    _

</llo_original>
